<compile_context>
chip_gen: v7x
topology: tpu7x:2x2x1
jax: 0.10.0
libtpu: 0.0.40
codegen_flags: <defaults>
</compile_context>

<pallas_src>
import functools

import jax
import jax.numpy as jnp
from jax.experimental import pallas as pl
from jax.experimental.pallas import tpu as pltpu


def _decoder_project_kernel(x_ref, w_ref, y_ref, *, mxu_bf16):
    """Per-frame K-tap projection on the MXU.

    x_ref: (1, C, T_TILE)  encoded frames, native NCT layout (C on sublanes, time on lanes)
    w_ref: (K, C)          transposed ConvTranspose1d weight (tiny, stays resident in VMEM)
    y_ref: (1, K, T_TILE)  y[k, t] = sum_c W[c, 0, k] * x[c, t]; lane-dense (time on lanes)
    """
    x = x_ref[0]
    w = w_ref[...]
    if mxu_bf16 and x.dtype == jnp.float32:
        # Single-pass bf16 MXU op (f32 accumulate) instead of a multi-pass f32 decomposition.
        x = x.astype(jnp.bfloat16)
        w = w.astype(jnp.bfloat16)
    y_ref[0] = jnp.dot(w, x, preferred_element_type=jnp.float32).astype(y_ref.dtype)


def _pick_t_tile(T, x_dtype):
    """Largest lane-dense time tile (multiple of 128) under the dtype-dependent VMEM cap."""
    cap = 8192 if jnp.dtype(x_dtype).itemsize <= 2 else 4096
    if T <= 128:
        return T                        # full-extent last dim is always a legal block
    return min(cap, (min(T, cap) // 128) * 128)


def decoder_forward(x_nct, weight_c1k, *, stride=8, t_tile=None, mxu_bf16=False):
    """Pallas implementation of Decoder.forward.

    x_nct:      (B, C, T)  encoded representation, PyTorch NCW layout (float32 or bfloat16)
    weight_c1k: (C, 1, K)  PyTorch ConvTranspose1d weight layout
    returns:    (B, 1, (T-1)*stride + K)  float32
    """
    B, C, T = x_nct.shape
    K = weight_c1k.shape[-1]
    assert K % stride == 0, "kernel assumes stride divides kernel_size"
    ratio = K // stride                  # output frames touched by each input frame
    n_frames = T + ratio - 1             # n_frames * stride == (T-1)*stride + K

    if t_tile is None:
        t_tile = _pick_t_tile(T, x_nct.dtype)
    n_tt = pl.cdiv(T, t_tile)            # partial last block handled by Pallas (no jnp.pad)

    # (C, 1, K) -> (K, C); tiny (16 x 512); match input dtype so bf16 inputs feed bf16 MXU.
    w_kc = jnp.transpose(weight_c1k[:, 0, :]).astype(x_nct.dtype)

    # Explicit VMEM budget: double-buffered input + output tiles + resident weight + margin.
    itemsize = jnp.dtype(x_nct.dtype).itemsize
    footprint = 2 * C * t_tile * itemsize + 2 * K * t_tile * 4 + 2 * K * C * itemsize
    vmem_limit = min(max(int(footprint * 1.5), 32 << 20), 48 << 20)

    kernel = functools.partial(_decoder_project_kernel, mxu_bf16=mxu_bf16)
    y = pl.pallas_call(
        kernel,
        out_shape=jax.ShapeDtypeStruct((B, K, T), jnp.float32),
        grid=(B, n_tt),
        in_specs=[
            pl.BlockSpec((1, C, t_tile), lambda b, t: (b, 0, t)),
            pl.BlockSpec((K, C), lambda b, t: (0, 0)),
        ],
        out_specs=pl.BlockSpec((1, K, t_tile), lambda b, t: (b, 0, t)),
        compiler_params=pltpu.CompilerParams(
            dimension_semantics=("parallel", "parallel"),
            vmem_limit_bytes=vmem_limit,
        ),
    )(x_nct, w_kc)

    # Overlap-add + final relayout on the small projection tensor (32x/16x smaller than x).
    frames = jnp.zeros((B, stride, n_frames), jnp.float32)    # frame-major, `stride`/frame
    for j in range(ratio):                                    # `ratio` static shifted adds
        frames = frames.at[:, :, j:j + T].add(y[:, j * stride:(j + 1) * stride, :])
    out = jnp.transpose(frames, (0, 2, 1)).reshape(B, 1, n_frames * stride)
    return out


def decoder_reference(x_nct, weight_c1k, *, stride=8):
    """Pure-JAX reference matching nn.ConvTranspose1d(C, 1, K, stride=stride, bias=False)."""
    B, C, T = x_nct.shape
    K = weight_c1k.shape[-1]
    L_out = (T - 1) * stride + K
    w_ck = weight_c1k[:, 0, :].astype(jnp.float32)
    y = jnp.einsum("bct,ck->btk", x_nct.astype(jnp.float32), w_ck)   # (B, T, K)
    out = jnp.zeros((B, L_out), jnp.float32)
    for k in range(K):
        out = out.at[:, k:k + (T - 1) * stride + 1:stride].add(y[:, :, k])
    return out[:, None, :]


if __name__ == "__main__":
    # Module defaults: kernel_size=16, stride=8, num_filters=512.
    kernel_size, stride, num_filters = 16, 8, 512
    B, T = 2, 256   # small, but enough for two time tiles at t_tile=128

    key = jax.random.PRNGKey(0)
    kx, kw = jax.random.split(key)
    # Encoded representation fed to the decoder: (B, num_filters, T)  (PyTorch NCW).
    x = jax.random.normal(kx, (B, num_filters, T), dtype=jnp.float32)
    bound = 1.0 / (num_filters ** 0.5)
    weight = jax.random.uniform(
        kw, (num_filters, 1, kernel_size), dtype=jnp.float32,
        minval=-bound, maxval=bound)                              # (C, 1, K)

    ref = decoder_reference(x, weight, stride=stride)
    L_out = (T - 1) * stride + kernel_size

    # 1) f32 path, forced t_tile=128 so the grid has multiple time tiles (exercises tiling).
    out = decoder_forward(x, weight, stride=stride, t_tile=128)
    out = jax.block_until_ready(out)
    assert out.shape == (B, 1, L_out), out.shape
    assert jnp.allclose(out, ref, atol=2e-3, rtol=2e-3), "f32 mismatch vs reference"

    # 2) Ragged T (not a multiple of the tile) -- exercises the cdiv grid / partial last
    #    block path that replaced the jnp.pad copy.
    T_r = 200
    x_r = x[:, :, :T_r]
    ref_r = decoder_reference(x_r, weight, stride=stride)
    out_r = decoder_forward(x_r, weight, stride=stride, t_tile=128)
    out_r = jax.block_until_ready(out_r)
    assert out_r.shape == (B, 1, (T_r - 1) * stride + kernel_size), out_r.shape
    assert jnp.allclose(out_r, ref_r, atol=2e-3, rtol=2e-3), "ragged-T mismatch vs reference"

    # 3) bf16 input path (halves HBM read traffic on real workloads); f32 accumulation, so
    #    only the bf16 input rounding separates it from the f32 reference.
    out_bf16 = decoder_forward(x.astype(jnp.bfloat16), weight, stride=stride)
    out_bf16 = jax.block_until_ready(out_bf16)
    assert jnp.allclose(out_bf16, ref, atol=5e-2, rtol=5e-2), "bf16 mismatch vs reference"

    # 4) f32 inputs with the in-kernel bf16 MXU cast (the v7x recommendation); looser
    #    tolerance since the C=512 reduction is no longer a true f32 dot.
    out_mxu = decoder_forward(x, weight, stride=stride, mxu_bf16=True)
    out_mxu = jax.block_until_ready(out_mxu)
    assert jnp.allclose(out_mxu, ref, atol=5e-2, rtol=5e-2), "mxu_bf16 mismatch vs reference"

    print("KERNEL_OK")
</pallas_src>

<mosaic_0001>
module attributes {stable_mosaic.version = 11 : i64} {
  func.func @_decoder_project_kernel(%arg0: i32, %arg1: i32, %arg2: memref<1x512x128xf32, #tpu.memory_space<vmem>>, %arg3: memref<16x512xf32, #tpu.memory_space<vmem>>, %arg4: memref<1x16x128xf32, #tpu.memory_space<vmem>>) attributes {dimension_semantics = [#tpu.dimension_semantics<parallel>, #tpu.dimension_semantics<parallel>], iteration_bounds = array<i64: 2, 2>, scalar_prefetch = 0 : i64, scratch_operands = 0 : i64, tpu.core_type = #tpu.core_type<tc>, window_params = [{transform_indices = @transform_0, window_bounds = array<i64: 1, 512, 128>}, {pipeline_mode = #tpu.pipeline_mode<synchronous>, transform_indices = @transform_1, window_bounds = array<i64: 16, 512>}, {transform_indices = @transform_2, window_bounds = array<i64: 1, 16, 128>}]} {
    %c0 = arith.constant 0 : index
    %c0_0 = arith.constant 0 : index
    %c0_1 = arith.constant 0 : index
    %0 = vector.load %arg2[%c0, %c0_0, %c0_1] : memref<1x512x128xf32, #tpu.memory_space<vmem>>, vector<1x512x128xf32>
    %1 = vector.shape_cast %0 : vector<1x512x128xf32> to vector<512x128xf32>
    %c0_2 = arith.constant 0 : index
    %c0_3 = arith.constant 0 : index
    %2 = vector.load %arg3[%c0_2, %c0_3] : memref<16x512xf32, #tpu.memory_space<vmem>>, vector<16x512xf32>
    %cst = arith.constant dense<0.000000e+00> : vector<16x128xf32>
    %3 = tpu.matmul %2, %1, %cst {dimension_numbers = #tpu.dot_dimension_numbers<[1], [0], [0], [1], [0, 0, 1, 1], [], []>} : vector<16x512xf32>, vector<512x128xf32>, vector<16x128xf32> -> vector<16x128xf32>
    %c0_4 = arith.constant 0 : index
    %c0_5 = arith.constant 0 : index
    %c0_6 = arith.constant 0 : index
    %4 = vector.load %arg4[%c0_4, %c0_5, %c0_6] : memref<1x16x128xf32, #tpu.memory_space<vmem>>, vector<1x16x128xf32>
    %5 = vector.shape_cast %4 : vector<1x16x128xf32> to vector<16x128xf32>
    %6 = vector.shape_cast %3 : vector<16x128xf32> to vector<1x16x128xf32>
    tpu.vector_store %arg4[%c0_4, %c0_5, %c0_6], %6 {strides = array<i32>} : memref<1x16x128xf32, #tpu.memory_space<vmem>>, vector<1x16x128xf32>,
    return
  }
  func.func @transform_0(%arg0: i32, %arg1: i32) -> (i32, i32, i32) {
    %c0_i32 = arith.constant 0 : i32
    %c0_i32_0 = arith.constant 0 : i32
    return %arg0, %c0_i32, %arg1 : i32, i32, i32
  }
  func.func @transform_1(%arg0: i32, %arg1: i32) -> (i32, i32) {
    %c0_i32 = arith.constant 0 : i32
    %c0_i32_0 = arith.constant 0 : i32
    %c0_i32_1 = arith.constant 0 : i32
    return %c0_i32, %c0_i32_0 : i32, i32
  }
  func.func @transform_2(%arg0: i32, %arg1: i32) -> (i32, i32, i32) {
    %c0_i32 = arith.constant 0 : i32
    %c0_i32_0 = arith.constant 0 : i32
    return %arg0, %c0_i32, %arg1 : i32, i32, i32
  }
}

</mosaic_0001>

<llo_original>
// kernel: tpu_custom_call.1
$region0: #{tpu_custom_call.1}
  #allocation0 [shape = 'u32[]', space=smem, size = 0x4, offset = 0x4, fixed_abs, tag = 'smem constant byte address 0x4 - core index']
  #allocation1 [shape = 'u32[144,128]{1,0:T(1,128)}', space=vmem, size = 0x12000, scoped, tag = 'internal scratch']
  %s0 = inlined_call_operand.hbm [shape: f32[2,512,256], index: 0, kind: input, shape index: {}]
  %s1 = inlined_call_operand.hbm [shape: f32[16,512], index: 1, kind: input, shape index: {}]
  %s2 = inlined_call_operand.hbm [shape: f32[2,16,256], index: 2, kind: output, shape index: {}]
  %s3 = sld [smem:[#allocation0]]
  $region49: #{tpu_custom_call.1} parent=0
    _
  %s5 = ssub.s32 1, %s3
  %s6 = scalar_select 0, %s5, %s3
  $region1: #{tpu_custom_call.1} parent=0
    #allocation2 [shape = 'u8[524288]{0}', space=vmem, size = 0x80000, scoped, tag = 'input window, operand 0']
    #allocation3 [shape = 's32[2]{0}', space=sflag, size = 0x8, scoped, tag = 'scoped memory for tpu_custom_call.1']
    #allocation4 [shape = 's32[2]{0}', space=sflag, size = 0x8, scoped, tag = 'scoped memory for tpu_custom_call.1']
    #allocation5 [shape = 'u8[32768]{0}', space=vmem, size = 0x8000, scoped, tag = 'input window, operand 1, single buffered']
    #allocation6 [shape = 's32[1]{0}', space=sflag, size = 0x4, scoped, tag = 'scoped memory for tpu_custom_call.1']
    #allocation7 [shape = 'u8[16384]{0}', space=vmem, size = 0x4000, scoped, tag = 'output window, operand 0']
    %7 = vsyncpa [#allocation3], 0
    %s8 = scalar_lea.sflag [#allocation3], 1
    %9 = vsyncpa %s8, 0
    %10 = vsyncpa [#allocation6], 0
    %11 = vsyncpa [#allocation4], 0
    %s12 = scalar_lea.sflag [#allocation4], 1
    %13 = vsyncpa %s12, 0
    loop: start=0, step=1, limit=6
    $region2: #{tpu_custom_call.1} parent=1 // loop_pre_header
      _
    $region3: #{tpu_custom_call.1} parent=1 // loop_header
      %s15 = sphi 0, %s19
      %p16 = scmp.ge.s32.totalorder %s15, 6
      %s22 = sphi 0, %s34
      %s23 = sphi 0, %s30
      %s24 = sphi 0, %s22
      %s25 = sphi 0, %s23
      %s26 = sphi 0, %s24
      %s27 = sphi 0, %s25
      %s39 = sphi 0, %s41
      %s42 = sphi 0, %s39
      %s43 = sphi 0, %s42
      %s59 = sphi 0, %s43
      %s63 = sphi 0, %s63
      %s65 = sphi 0, %s63
      %s66 = sphi 0, %s65
      %s80 = sphi 0, %s66
      %s88 = sphi 0, %s90
      %s91 = sphi 0, %s88
      %s92 = sphi 0, %s91
      %s108 = sphi 0, %s92
    $region4: #{tpu_custom_call.1} parent=1 // loop_header_branch
      %18 = sbr.rel (%p16) target = $region8
    $region5: #{tpu_custom_call.1} parent=1 // loop_body
      %s20 = ssub.s32 %s15, 1
      %s21 = ssub.s32 %s15, 2
      %s28 = sadd.s32 1, %s23
      %p29 = scmp.ge.s32.totalorder %s28, 2
      %s30 = scalar_select %p29, 0, %s28
      %s31 = sadd.s32 1, %s22
      %s32 = scalar_select %p29, %s31, %s22
      %p33 = scmp.ge.s32.totalorder %s32, 2
      %s34 = scalar_select %p33, 0, %s32
      %s35 = ssub.s32 %s22, %s34
      %s36 = ssub.s32 %s23, %s30
      %s37 = sor.u32 %s35, %s36
      %p38 = scmp.eq.s32.totalorder %s37, 0
      %s40 = sadd.s32 %s39, 1
      %s41 = scalar_select %p38, %s39, %s40
      %p44 = pneg %p38
      %p45 = scmp.eq.s32.totalorder %s15, 3
      %p46 = por %p44, %p45
      %p47 = scmp.ne.s32.totalorder %s39, %s42
      %p48 = scmp.eq.s32.totalorder %s15, 0
      %p49 = por %p47, %p48
      %p50 = scmp.ne.s32.totalorder %s39, %s42
      %p51 = scmp.eq.s32.totalorder %s20, 3
      %p52 = por %p50, %p51
      %p53 = scmp.ne.s32.totalorder %s42, %s43
      %p54 = scmp.eq.s32.totalorder %s20, 0
      %p55 = por %p53, %p54
      %p56 = scmp.ne.s32.totalorder %s42, %s43
      %p57 = scmp.eq.s32.totalorder %s21, 3
      %p58 = por %p56, %p57
      %p60 = scmp.ne.s32.totalorder %s43, %s59
      %p61 = scmp.eq.s32.totalorder %s21, 0
      %p62 = por %p60, %p61
      %s64 = sadd.s32 %s63, 1
      %p67 = scmp.eq.s32.totalorder %s15, 3
      %p68 = scmp.ne.s32.totalorder %s63, %s65
      %p69 = scmp.eq.s32.totalorder %s15, 0
      %p70 = por %p68, %p69
      %p71 = scmp.ne.s32.totalorder %s63, %s65
      %p72 = scmp.eq.s32.totalorder %s20, 3
      %p73 = por %p71, %p72
      %p74 = scmp.ne.s32.totalorder %s65, %s66
      %p75 = scmp.eq.s32.totalorder %s20, 0
      %p76 = por %p74, %p75
      %p77 = scmp.ne.s32.totalorder %s65, %s66
      %p78 = scmp.eq.s32.totalorder %s21, 3
      %p79 = por %p77, %p78
      %p81 = scmp.ne.s32.totalorder %s66, %s80
      %p82 = scmp.eq.s32.totalorder %s21, 0
      %p83 = por %p81, %p82
      %s84 = ssub.s32 %s22, %s34
      %s85 = ssub.s32 %s23, %s30
      %s86 = sor.u32 %s84, %s85
      %p87 = scmp.eq.s32.totalorder %s86, 0
      %s89 = sadd.s32 %s88, 1
      %s90 = scalar_select %p87, %s88, %s89
      %p93 = pneg %p87
      %p94 = scmp.eq.s32.totalorder %s15, 3
      %p95 = por %p93, %p94
      %p96 = scmp.ne.s32.totalorder %s88, %s91
      %p97 = scmp.eq.s32.totalorder %s15, 0
      %p98 = por %p96, %p97
      %p99 = scmp.ne.s32.totalorder %s88, %s91
      %p100 = scmp.eq.s32.totalorder %s20, 3
      %p101 = por %p99, %p100
      %p102 = scmp.ne.s32.totalorder %s91, %s92
      %p103 = scmp.eq.s32.totalorder %s20, 0
      %p104 = por %p102, %p103
      %p105 = scmp.ne.s32.totalorder %s91, %s92
      %p106 = scmp.eq.s32.totalorder %s21, 3
      %p107 = por %p105, %p106
      %p109 = scmp.ne.s32.totalorder %s92, %s108
      %p110 = scmp.eq.s32.totalorder %s21, 0
      %p111 = por %p109, %p110
      %p112 = scmp.le.s32.totalorder 1, %s15
      %p113 = scmp.lt.s32.totalorder %s15, 5
      %p114 = pnand %p112, %p113
      %p115 = pneg %p114
      // Predicated region
      $region9: #{tpu_custom_call.1} parent=5 // pred_check
        _
      $region10: #{tpu_custom_call.1} parent=5 // pred_check_branch
        %117 = sbr.rel (%p114) target = $region12
      $region11: #{tpu_custom_call.1} parent=5 // pred_region
        %s118 = ssub.s32 %s15, 1
        // Predicated region
        $region13: #{tpu_custom_call.1} parent=11 // pred_check
          %p119 = pneg %p76
        $region14: #{tpu_custom_call.1} parent=11 // pred_check_branch
          %121 = sbr.rel (%p119) target = $region16
        $region15: #{tpu_custom_call.1} parent=11 // pred_region
          %s123 = ssub.s32 1024, 1024
          %124 = vsyncadd [#allocation6], %s123
          %s125 = sshll.u32 [#allocation5], 4
          %s126 = int_to_ptr.vmem [resolvable:$true] %s125
          %131 = dma.hbm_to_vmem [thread:$0]  %s1, 1024, %s126, [#allocation6], 512, 512, 32
        $region16: #{tpu_custom_call.1} parent=11 // pred_fallthru
          _
      $region12: #{tpu_custom_call.1} parent=5 // pred_fallthru
        _
      %p132 = scmp.lt.s32.totalorder %s15, 4
      // Predicated region
      $region17: #{tpu_custom_call.1} parent=5 // pred_check
        %p133 = pneg %p132
      $region18: #{tpu_custom_call.1} parent=5 // pred_check_branch
        %135 = sbr.rel (%p133) target = $region20
      $region19: #{tpu_custom_call.1} parent=5 // pred_region
        // Predicated region
        $region21: #{tpu_custom_call.1} parent=19 // pred_check
          %p136 = pneg %p49
        $region22: #{tpu_custom_call.1} parent=19 // pred_check_branch
          %138 = sbr.rel (%p136) target = $region24
        $region23: #{tpu_custom_call.1} parent=19 // pred_region
          %s139 = sand.u32 %s39, 1
          %s140 = scalar_lea.sflag [#allocation3], %s139
          %s141 = sand.u32 %s39, 1
          %s142 = smul.addr %s141, 512
          %s143 = scalar_lea.vmem [#allocation2], %s142
          %s145 = ssub.s32 8192, 8192
          %146 = vsyncadd %s140, %s145
          %s147 = smul.addr %s22, 128
          %s148 = sadd.s32 %s23, %s147
          %s149 = smul.addr %s148, 128
          %s150 = scalar_lea.hbm %s0, %s149
          %s151 = sshll.u32 %s143, 4
          %s152 = int_to_ptr.vmem [resolvable:$true] %s151
          %157 = dma.hbm_to_vmem [thread:$0]  %s150, 8192, %s152, %s140, 256, 128, 8
        $region24: #{tpu_custom_call.1} parent=19 // pred_fallthru
          _
      $region20: #{tpu_custom_call.1} parent=5 // pred_fallthru
        _
      %p158 = scmp.le.s32.totalorder 1, %s15
      %p159 = scmp.lt.s32.totalorder %s15, 5
      %p160 = pnand %p158, %p159
      %p161 = pneg %p160
      // Predicated region
      $region25: #{tpu_custom_call.1} parent=5 // pred_check
        _
      $region26: #{tpu_custom_call.1} parent=5 // pred_check_branch
        %163 = sbr.rel (%p160) target = $region28
      $region27: #{tpu_custom_call.1} parent=5 // pred_region
        %s164 = ssub.s32 %s15, 1
        %s165 = sand.u32 %s42, 1
        %s166 = scalar_lea.sflag [#allocation3], %s165
        %s167 = sand.u32 %s42, 1
        %s168 = smul.addr %s167, 512
        %s169 = scalar_lea.vmem [#allocation2], %s168
        // Predicated region
        $region29: #{tpu_custom_call.1} parent=27 // pred_check
          %p170 = pneg %p55
        $region30: #{tpu_custom_call.1} parent=27 // pred_check_branch
          %172 = sbr.rel (%p170) target = $region32
        $region31: #{tpu_custom_call.1} parent=27 // pred_region
          %173 = dma.done %s166, 8192
        $region32: #{tpu_custom_call.1} parent=27 // pred_fallthru
          _
        // Predicated region
        $region33: #{tpu_custom_call.1} parent=27 // pred_check
          %p174 = pneg %p76
        $region34: #{tpu_custom_call.1} parent=27 // pred_check_branch
          %176 = sbr.rel (%p174) target = $region36
        $region35: #{tpu_custom_call.1} parent=27 // pred_region
          %177 = dma.done [#allocation6], 1024
        $region36: #{tpu_custom_call.1} parent=27 // pred_fallthru
          _
        %s178 = sand.u32 %s42, 1
        %s179 = scalar_lea.sflag [#allocation3], %s178
        %s180 = sand.u32 %s42, 1
        %s181 = smul.addr %s180, 512
        %s182 = scalar_lea.vmem [#allocation2], %s181
        %p183 = pneg %p55
        %p184 = pneg %p52
        %p185 = pneg %p76
        %p186 = pneg %p73
        %p187 = pneg %p104
        %p188 = pneg %p101
        %s189 = sand.u32 %s91, 1
        %s190 = scalar_lea.sflag [#allocation4], %s189
        %s191 = sand.u32 %s91, 1
        %s192 = smul.addr %s191, 16
        %s193 = scalar_lea.vmem [#allocation7], %s192
        %v194 = vld [vmem:[%s169] sm:$0xff]
        %v195 = vld [vmem:[%s169 + $0x8] sm:$0xff]
        %v196 = vld [vmem:[%s169 + $0x10] sm:$0xff]
        %v197 = vld [vmem:[%s169 + $0x18] sm:$0xff]
        %v198 = vld [vmem:[%s169 + $0x20] sm:$0xff]
        %v199 = vld [vmem:[%s169 + $0x28] sm:$0xff]
        %v200 = vld [vmem:[%s169 + $0x30] sm:$0xff]
        %v201 = vld [vmem:[%s169 + $0x38] sm:$0xff]
        %v202 = vld [vmem:[%s169 + $0x40] sm:$0xff]
        %v203 = vld [vmem:[%s169 + $0x48] sm:$0xff]
        %v204 = vld [vmem:[%s169 + $0x50] sm:$0xff]
        %v205 = vld [vmem:[%s169 + $0x58] sm:$0xff]
        %v206 = vld [vmem:[%s169 + $0x60] sm:$0xff]
        %v207 = vld [vmem:[%s169 + $0x68] sm:$0xff]
        %v208 = vld [vmem:[%s169 + $0x70] sm:$0xff]
        %v209 = vld [vmem:[%s169 + $0x78] sm:$0xff]
        %v210 = vld [vmem:[%s169 + $0x80] sm:$0xff]
        %v211 = vld [vmem:[%s169 + $0x88] sm:$0xff]
        %v212 = vld [vmem:[%s169 + $0x90] sm:$0xff]
        %v213 = vld [vmem:[%s169 + $0x98] sm:$0xff]
        %v214 = vld [vmem:[%s169 + $0xa0] sm:$0xff]
        %v215 = vld [vmem:[%s169 + $0xa8] sm:$0xff]
        %v216 = vld [vmem:[%s169 + $0xb0] sm:$0xff]
        %v217 = vld [vmem:[%s169 + $0xb8] sm:$0xff]
        %v218 = vld [vmem:[%s169 + $0xc0] sm:$0xff]
        %v219 = vld [vmem:[%s169 + $0xc8] sm:$0xff]
        %v220 = vld [vmem:[%s169 + $0xd0] sm:$0xff]
        %v221 = vld [vmem:[%s169 + $0xd8] sm:$0xff]
        %v222 = vld [vmem:[%s169 + $0xe0] sm:$0xff]
        %v223 = vld [vmem:[%s169 + $0xe8] sm:$0xff]
        %v224 = vld [vmem:[%s169 + $0xf0] sm:$0xff]
        %v225 = vld [vmem:[%s169 + $0xf8] sm:$0xff]
        %v226 = vld [vmem:[%s169 + $0x100] sm:$0xff]
        %v227 = vld [vmem:[%s169 + $0x108] sm:$0xff]
        %v228 = vld [vmem:[%s169 + $0x110] sm:$0xff]
        %v229 = vld [vmem:[%s169 + $0x118] sm:$0xff]
        %v230 = vld [vmem:[%s169 + $0x120] sm:$0xff]
        %v231 = vld [vmem:[%s169 + $0x128] sm:$0xff]
        %v232 = vld [vmem:[%s169 + $0x130] sm:$0xff]
        %v233 = vld [vmem:[%s169 + $0x138] sm:$0xff]
        %v234 = vld [vmem:[%s169 + $0x140] sm:$0xff]
        %v235 = vld [vmem:[%s169 + $0x148] sm:$0xff]
        %v236 = vld [vmem:[%s169 + $0x150] sm:$0xff]
        %v237 = vld [vmem:[%s169 + $0x158] sm:$0xff]
        %v238 = vld [vmem:[%s169 + $0x160] sm:$0xff]
        %v239 = vld [vmem:[%s169 + $0x168] sm:$0xff]
        %v240 = vld [vmem:[%s169 + $0x170] sm:$0xff]
        %v241 = vld [vmem:[%s169 + $0x178] sm:$0xff]
        %v242 = vld [vmem:[%s169 + $0x180] sm:$0xff]
        %v243 = vld [vmem:[%s169 + $0x188] sm:$0xff]
        %v244 = vld [vmem:[%s169 + $0x190] sm:$0xff]
        %v245 = vld [vmem:[%s169 + $0x198] sm:$0xff]
        %v246 = vld [vmem:[%s169 + $0x1a0] sm:$0xff]
        %v247 = vld [vmem:[%s169 + $0x1a8] sm:$0xff]
        %v248 = vld [vmem:[%s169 + $0x1b0] sm:$0xff]
        %v249 = vld [vmem:[%s169 + $0x1b8] sm:$0xff]
        %v250 = vld [vmem:[%s169 + $0x1c0] sm:$0xff]
        %v251 = vld [vmem:[%s169 + $0x1c8] sm:$0xff]
        %v252 = vld [vmem:[%s169 + $0x1d0] sm:$0xff]
        %v253 = vld [vmem:[%s169 + $0x1d8] sm:$0xff]
        %v254 = vld [vmem:[%s169 + $0x1e0] sm:$0xff]
        %v255 = vld [vmem:[%s169 + $0x1e8] sm:$0xff]
        %v256 = vld [vmem:[%s169 + $0x1f0] sm:$0xff]
        %v257 = vld [vmem:[%s169 + $0x1f8] sm:$0xff]
        %v258 = vld [vmem:[#allocation5] sm:$0xff]
        %v259 = vld [vmem:[#allocation5 + $0x8] sm:$0xff]
        %v260 = vld [vmem:[#allocation5 + $0x10] sm:$0xff]
        %v261 = vld [vmem:[#allocation5 + $0x18] sm:$0xff]
        %v262 = vld [vmem:[#allocation5 + $0x20] sm:$0xff]
        %v263 = vld [vmem:[#allocation5 + $0x28] sm:$0xff]
        %v264 = vld [vmem:[#allocation5 + $0x30] sm:$0xff]
        %v265 = vld [vmem:[#allocation5 + $0x38] sm:$0xff]
        %266 = vmatprep.subr.mxu0 0.0
        %267 = vmatpush1.msra.mxu0 %v194
        %268 = vmatprep.subr.mxu0 0.0
        %269 = vmatpush1.msra.mxu0 %v195
        %270 = vmatprep.subr.mxu0 0.0
        %271 = vmatpush1.msra.mxu0 %v196
        %272 = vmatprep.subr.mxu0 0.0
        %273 = vmatpush1.msra.mxu0 %v197
        %274 = vmatprep.subr.mxu0 0.0
        %275 = vmatpush1.msra.mxu0 %v198
        %276 = vmatprep.subr.mxu0 0.0
        %277 = vmatpush1.msra.mxu0 %v199
        %278 = vmatprep.subr.mxu0 0.0
        %279 = vmatpush1.msra.mxu0 %v200
        %280 = vmatprep.subr.mxu0 0.0
        %281 = vmatpush1.msra.mxu0 %v201
        %282 = vmatprep.subr.mxu0 0.0
        %283 = vmatpush1.msra.mxu0 %v202
        %284 = vmatprep.subr.mxu0 0.0
        %285 = vmatpush1.msra.mxu0 %v203
        %286 = vmatprep.subr.mxu0 0.0
        %287 = vmatpush1.msra.mxu0 %v204
        %288 = vmatprep.subr.mxu0 0.0
        %289 = vmatpush1.msra.mxu0 %v205
        %290 = vmatprep.subr.mxu0 0.0
        %291 = vmatpush1.msra.mxu0 %v206
        %292 = vmatprep.subr.mxu0 0.0
        %293 = vmatpush1.msra.mxu0 %v207
        %294 = vmatprep.subr.mxu0 0.0
        %295 = vmatpush1.msra.mxu0 %v208
        %296 = vmatprep.subr.mxu0 0.0
        %297 = vmatpush1.msra.mxu0 %v209
        %298 = vmatprep.subr.mxu0 0.0
        %299 = vmatpush1.msra.mxu0 %v210
        %300 = vmatprep.subr.mxu0 0.0
        %301 = vmatpush1.msra.mxu0 %v211
        %302 = vmatprep.subr.mxu0 0.0
        %303 = vmatpush1.msra.mxu0 %v212
        %304 = vmatprep.subr.mxu0 0.0
        %305 = vmatpush1.msra.mxu0 %v213
        %306 = vmatprep.subr.mxu0 0.0
        %307 = vmatpush1.msra.mxu0 %v214
        %308 = vmatprep.subr.mxu0 0.0
        %309 = vmatpush1.msra.mxu0 %v215
        %310 = vmatprep.subr.mxu0 0.0
        %311 = vmatpush1.msra.mxu0 %v216
        %312 = vmatprep.subr.mxu0 0.0
        %313 = vmatpush1.msra.mxu0 %v217
        %314 = vmatprep.subr.mxu0 0.0
        %315 = vmatpush1.msra.mxu0 %v218
        %316 = vmatprep.subr.mxu0 0.0
        %317 = vmatpush1.msra.mxu0 %v219
        %318 = vmatprep.subr.mxu0 0.0
        %319 = vmatpush1.msra.mxu0 %v220
        %320 = vmatprep.subr.mxu0 0.0
        %321 = vmatpush1.msra.mxu0 %v221
        %322 = vmatprep.subr.mxu0 0.0
        %323 = vmatpush1.msra.mxu0 %v222
        %324 = vmatprep.subr.mxu0 0.0
        %325 = vmatpush1.msra.mxu0 %v223
        %326 = vmatprep.subr.mxu0 0.0
        %327 = vmatpush1.msra.mxu0 %v224
        %328 = vmatprep.subr.mxu0 0.0
        %329 = vmatpush1.msra.mxu0 %v225
        %330 = vmatprep.mubr.f32.mxu0 %v259
        %331 = vmatmul.mubr.f32.gmra.mrb[0].mxu0 %v258
        %v332 = vpop.f32.mrb[0].mxu0
        %v333 = vadd.f32 0.0, %v332
        %v334 = vpop.f32.mrb[0].mxu0
        %335 = vmatprep.mubr.f32.mxu0 %v263
        %336 = vmatmul.mubr.f32.gmra.mrb[0].mxu0 %v262
        %v337 = vpop.f32.mrb[0].mxu0
        %v338 = vadd.f32 0.0, %v337
        %v339 = vpop.f32.mrb[0].mxu0
        %340 = vdwg.mxu0
        %341 = vmatprep.subr.mxu0 0.0
        %342 = vmatpush1.msra.mxu0 %v226
        %343 = vmatprep.subr.mxu0 0.0
        %344 = vmatpush1.msra.mxu0 %v227
        %345 = vmatprep.subr.mxu0 0.0
        %346 = vmatpush1.msra.mxu0 %v228
        %347 = vmatprep.subr.mxu0 0.0
        %348 = vmatpush1.msra.mxu0 %v229
        %349 = vmatprep.subr.mxu0 0.0
        %350 = vmatpush1.msra.mxu0 %v230
        %351 = vmatprep.subr.mxu0 0.0
        %352 = vmatpush1.msra.mxu0 %v231
        %353 = vmatprep.subr.mxu0 0.0
        %354 = vmatpush1.msra.mxu0 %v232
        %355 = vmatprep.subr.mxu0 0.0
        %356 = vmatpush1.msra.mxu0 %v233
        %357 = vmatprep.subr.mxu0 0.0
        %358 = vmatpush1.msra.mxu0 %v234
        %359 = vmatprep.subr.mxu0 0.0
        %360 = vmatpush1.msra.mxu0 %v235
        %361 = vmatprep.subr.mxu0 0.0
        %362 = vmatpush1.msra.mxu0 %v236
        %363 = vmatprep.subr.mxu0 0.0
        %364 = vmatpush1.msra.mxu0 %v237
        %365 = vmatprep.subr.mxu0 0.0
        %366 = vmatpush1.msra.mxu0 %v238
        %367 = vmatprep.subr.mxu0 0.0
        %368 = vmatpush1.msra.mxu0 %v239
        %369 = vmatprep.subr.mxu0 0.0
        %370 = vmatpush1.msra.mxu0 %v240
        %371 = vmatprep.subr.mxu0 0.0
        %372 = vmatpush1.msra.mxu0 %v241
        %373 = vmatprep.subr.mxu0 0.0
        %374 = vmatpush1.msra.mxu0 %v242
        %375 = vmatprep.subr.mxu0 0.0
        %376 = vmatpush1.msra.mxu0 %v243
        %377 = vmatprep.subr.mxu0 0.0
        %378 = vmatpush1.msra.mxu0 %v244
        %379 = vmatprep.subr.mxu0 0.0
        %380 = vmatpush1.msra.mxu0 %v245
        %381 = vmatprep.subr.mxu0 0.0
        %382 = vmatpush1.msra.mxu0 %v246
        %383 = vmatprep.subr.mxu0 0.0
        %384 = vmatpush1.msra.mxu0 %v247
        %385 = vmatprep.subr.mxu0 0.0
        %386 = vmatpush1.msra.mxu0 %v248
        %387 = vmatprep.subr.mxu0 0.0
        %388 = vmatpush1.msra.mxu0 %v249
        %389 = vmatprep.subr.mxu0 0.0
        %390 = vmatpush1.msra.mxu0 %v250
        %391 = vmatprep.subr.mxu0 0.0
        %392 = vmatpush1.msra.mxu0 %v251
        %393 = vmatprep.subr.mxu0 0.0
        %394 = vmatpush1.msra.mxu0 %v252
        %395 = vmatprep.subr.mxu0 0.0
        %396 = vmatpush1.msra.mxu0 %v253
        %397 = vmatprep.subr.mxu0 0.0
        %398 = vmatpush1.msra.mxu0 %v254
        %399 = vmatprep.subr.mxu0 0.0
        %400 = vmatpush1.msra.mxu0 %v255
        %401 = vmatprep.subr.mxu0 0.0
        %402 = vmatpush1.msra.mxu0 %v256
        %403 = vmatprep.subr.mxu0 0.0
        %404 = vmatpush1.msra.mxu0 %v257
        %405 = vmatprep.mubr.f32.mxu0 %v261
        %406 = vmatmul.mubr.f32.gmra.mrb[0].mxu0 %v260
        %v407 = vpop.f32.mrb[0].mxu0
        %v408 = vadd.f32 %v333, %v407
        %v409 = vpop.f32.mrb[0].mxu0
        %410 = vmatprep.mubr.f32.mxu0 %v265
        %411 = vmatmul.mubr.f32.gmra.mrb[0].mxu0 %v264
        %v412 = vpop.f32.mrb[0].mxu0
        %v413 = vadd.f32 %v338, %v412
        %v414 = vpop.f32.mrb[0].mxu0
        %415 = vdwg.mxu0
        %416 = vst [vmem:[%s193] sm:$0xff] %v408
        %417 = vst [vmem:[%s193 + $0x8] sm:$0xff] %v413
        %s418 = sand.u32 %s91, 1
        %s419 = scalar_lea.sflag [#allocation4], %s418
        %s420 = sand.u32 %s91, 1
        %s421 = smul.addr %s420, 16
        %s422 = scalar_lea.vmem [#allocation7], %s421
        // Predicated region
        $region37: #{tpu_custom_call.1} parent=27 // pred_check
          %p423 = pneg %p101
        $region38: #{tpu_custom_call.1} parent=27 // pred_check_branch
          %425 = sbr.rel (%p423) target = $region40
        $region39: #{tpu_custom_call.1} parent=27 // pred_region
          %s427 = ssub.s32 256, 256
          %428 = vsyncadd %s419, %s427
          %s429 = smul.addr %s24, 4
          %s430 = sadd.s32 %s25, %s429
          %s431 = smul.addr %s430, 128
          %s432 = scalar_lea.hbm %s2, %s431
          %s433 = sshll.u32 %s422, 4
          %s434 = int_to_ptr.vmem [resolvable:$true] %s433
          %439 = dma.vmem_to_hbm [thread:$0]  %s434, 256, %s432, %s419, 128, 256, 8
        $region40: #{tpu_custom_call.1} parent=27 // pred_fallthru
          _
      $region28: #{tpu_custom_call.1} parent=5 // pred_fallthru
        _
      %p440 = scmp.le.s32.totalorder 2, %s15
      // Predicated region
      $region41: #{tpu_custom_call.1} parent=5 // pred_check
        %p441 = pneg %p440
      $region42: #{tpu_custom_call.1} parent=5 // pred_check_branch
        %443 = sbr.rel (%p441) target = $region44
      $region43: #{tpu_custom_call.1} parent=5 // pred_region
        %s444 = ssub.s32 %s15, 2
        // Predicated region
        $region45: #{tpu_custom_call.1} parent=43 // pred_check
          %p445 = pneg %p107
        $region46: #{tpu_custom_call.1} parent=43 // pred_check_branch
          %447 = sbr.rel (%p445) target = $region48
        $region47: #{tpu_custom_call.1} parent=43 // pred_region
          %s448 = sand.u32 %s92, 1
          %s449 = scalar_lea.sflag [#allocation4], %s448
          %s450 = sand.u32 %s92, 1
          %s451 = smul.addr %s450, 16
          %s452 = scalar_lea.vmem [#allocation7], %s451
          %453 = dma.done %s449, 256
        $region48: #{tpu_custom_call.1} parent=43 // pred_fallthru
          _
      $region44: #{tpu_custom_call.1} parent=5 // pred_fallthru
        _
    $region6: #{tpu_custom_call.1} parent=1 // loop_footer
      %s19 = sadd.s32 1, %s15
    $region7: #{tpu_custom_call.1} parent=1 // loop_footer_branch
      %14 = sbr.rel target = $region3
    $region8: #{tpu_custom_call.1} parent=1 // loop_exit
      _
    %454 = vsyncpa [#allocation3], 1
    %s455 = scalar_lea.sflag [#allocation3], 1
    %456 = vsyncpa %s455, 1
    %457 = vsyncpa [#allocation6], 1
    %458 = vsyncpa [#allocation4], 1
    %s459 = scalar_lea.sflag [#allocation4], 1
    %460 = vsyncpa %s459, 1

</llo_original>
